<compile_context>
chip_gen: v7x
topology: tpu7x:2x2x1
jax: 0.10.0
libtpu: 0.0.40
codegen_flags: <defaults>
</compile_context>

<pallas_src>
import functools

import jax
import jax.numpy as jnp
from jax.experimental import pallas as pl
from jax.experimental.pallas import tpu as pltpu

_MIB = 1024 * 1024


def _vmem_capacity_bytes():
    """Best-effort per-core VMEM size (v5e/v6e: 128 MiB, v7x: 64 MiB)."""
    try:
        return int(pltpu.get_tpu_info().vmem_capacity_bytes)
    except Exception:
        return 64 * _MIB  # conservative (v7x-sized) default


def _divisors(n):
    return [d for d in range(1, n + 1) if n % d == 0]


# ----------------------------------------------------------------------------
# Dense path: natural (B, 2C, L, L) layout.  Lane-dense when L % 128 == 0;
# also used as a masked-store fallback for awkward L with no flat tiling.
# ----------------------------------------------------------------------------
def _dense_kernel(x_ref, o_ref, *, c_blk, i_blk, L, full_i):
    # x_ref: (C, L)  per-batch input, VMEM-resident across (half, ct, it) axes.
    # o_ref: (c_blk, i_blk, L) output tile.
    h = pl.program_id(0)                                    # 0: vert, 1: horz
    c0 = pl.multiple_of(pl.program_id(2) * c_blk, c_blk)    # channel tile start

    @pl.when(h == 0)
    def _():  # out[b, c0 + c, i0 + i, j] = x[b, c0 + c, i0 + i]
        if full_i:
            xi = x_ref[pl.ds(c0, c_blk), :]                 # (c_blk, L)
        else:
            i0 = pl.multiple_of(pl.program_id(3) * i_blk, i_blk)
            xi = x_ref[pl.ds(c0, c_blk), pl.ds(i0, i_blk)]  # (c_blk, i_blk)
        # TODO(synk): if this broadcast lowers to an XLU relayout that shows on
        # v7x's critical path (tiles drain in ~2.6us at 3.2 TB/s), switch the
        # vert half to a one-hot MXU matmul against a flattened output block.
        o_ref[...] = jnp.broadcast_to(xi[:, :, None], (c_blk, i_blk, L))

    @pl.when(h == 1)
    def _():  # out[b, C + c0 + c, i0 + i, j] = x[b, c0 + c, j]
        xr = x_ref[pl.ds(c0, c_blk), :]                     # (c_blk, L)
        o_ref[...] = jnp.broadcast_to(xr[:, None, :], (c_blk, i_blk, L))


def _dense_call(x, vmem_budget, vmem_cap):
    B, C, L = x.shape
    isz = x.dtype.itemsize
    in_bytes = C * L * isz
    # Dtype-aware sublane multiple: 8 rows (f32), 16 (bf16), 32 (int8/fp8).
    sub = max(8, 32 // isz)
    i_legal = sorted({d for d in _divisors(L) if d % sub == 0} | {L},
                     reverse=True)

    # Maximize i_blk first (largest contiguous HBM write chunks), then c_blk.
    # Fit filter counts pipeline double-buffering of output and input blocks.
    c_blk, i_blk = 1, i_legal[-1]
    for ib in i_legal:
        fitting = [cb for cb in _divisors(C)
                   if 2 * (cb * ib * L * isz + in_bytes) <= vmem_budget]
        if fitting:
            i_blk, c_blk = ib, max(fitting)
            break
    n_ct, n_it = C // c_blk, L // i_blk

    out_bytes = c_blk * i_blk * L * isz
    vmem_limit = int(min(vmem_cap,
                         max(2 * (out_bytes + in_bytes) + 8 * _MIB, 32 * _MIB)))
    total_bytes = B * (2 * C * L * L + C * L) * isz

    kernel = functools.partial(_dense_kernel, c_blk=c_blk, i_blk=i_blk, L=L,
                               full_i=(i_blk == L))
    return pl.pallas_call(
        kernel,
        out_shape=jax.ShapeDtypeStruct((B, 2 * C, L, L), x.dtype),
        # Half axis (size 2) outermost -> real megacore split even when B == 1.
        grid=(2, B, n_ct, n_it),
        in_specs=[pl.BlockSpec((None, C, L), lambda h, b, ct, it: (b, 0, 0))],
        out_specs=pl.BlockSpec(
            (None, c_blk, i_blk, L),
            lambda h, b, ct, it: (b, h * n_ct + ct, it, 0)),
        compiler_params=pltpu.CompilerParams(
            dimension_semantics=("parallel",) * 4,
            vmem_limit_bytes=vmem_limit),
        cost_estimate=pl.CostEstimate(flops=0, transcendentals=0,
                                      bytes_accessed=int(total_bytes)),
    )(x)


# ----------------------------------------------------------------------------
# Flat path (L % 128 != 0): write a lane-dense flattened (B, 2, C, L*L) output
# (reshaped to (B, 2C, L, L) for free in the wrapper) so stores/DMAs are not
# lane-masked.  Flattened rows are produced with one-hot matmuls on the idle
# MXU.  With m = k * L + j the flat index inside a tile of i_blk output rows:
#   E[k, m] = [m // L == k]  ->  (x i-chunk) @ E repeats each x[c, i0+k] L times
#   F[j, m] = [m %  L == j]  ->  (x row)     @ F tiles x[c, :] i_blk times
# The F-product is i-tile-invariant, so it is cached in VMEM per (half, batch).
# ----------------------------------------------------------------------------
def _flat_kernel(x_ref, e_ref, f_ref, o_ref, horz_ref, *, i_blk, full_i):
    # x_ref: (C, L); e_ref: (i_blk, i_blk*L); f_ref: (L, i_blk*L)
    # o_ref: (C, i_blk*L); horz_ref: VMEM scratch (C, i_blk*L)
    h = pl.program_id(0)
    it = pl.program_id(2)

    @pl.when(h == 0)
    def _():  # flat element m = k*L + j  ->  x[c, i0 + k]
        if full_i:
            xi = x_ref[...]                                 # (C, L)
        else:
            i0 = pl.multiple_of(it * i_blk, i_blk)
            xi = x_ref[:, pl.ds(i0, i_blk)]                 # (C, i_blk)
        # One-hot weights -> HIGHEST is exact.  TODO(synk): a 3-pass bf16 dot
        # algorithm (also exact for one-hot) would halve MXU passes on v5e if
        # Mosaic grows support for DotAlgorithmPreset in-kernel.
        o_ref[...] = jnp.dot(
            xi, e_ref[...], precision=jax.lax.Precision.HIGHEST,
            preferred_element_type=jnp.float32).astype(o_ref.dtype)

    @pl.when(h == 1)
    def _():  # flat element m = k*L + j  ->  x[c, j]  (same for every i-tile)
        @pl.when(it == 0)
        def _():
            horz_ref[...] = jnp.dot(
                x_ref[...], f_ref[...], precision=jax.lax.Precision.HIGHEST,
                preferred_element_type=jnp.float32).astype(o_ref.dtype)
        o_ref[...] = horz_ref[...]


def _flat_call(x, vmem_budget, vmem_cap):
    B, C, L = x.shape
    isz = x.dtype.itemsize
    in_bytes = C * L * isz

    def live_bytes(ib):  # 2x double-buffered out/x/e/f + 1x horz scratch
        out_b = C * ib * L * isz
        e_b = ib * ib * L * isz
        f_b = L * ib * L * isz
        return 2 * (out_b + in_bytes + e_b + f_b) + out_b

    # i_blk | L with lane-dense flattened rows, and everything must fit VMEM.
    cand = [d for d in _divisors(L) if (d * L) % 128 == 0]
    fitting = [d for d in cand if live_bytes(d) <= vmem_budget]
    if not fitting:
        return None               # caller falls back to masked-store dense path
    i_blk = max(fitting)
    n_it = L // i_blk

    m = jnp.arange(i_blk * L, dtype=jnp.int32)
    e_mat = (m[None, :] // L ==
             jnp.arange(i_blk, dtype=jnp.int32)[:, None]).astype(x.dtype)
    f_mat = (m[None, :] % L ==
             jnp.arange(L, dtype=jnp.int32)[:, None]).astype(x.dtype)

    vmem_limit = int(min(vmem_cap,
                         max(live_bytes(i_blk) + 8 * _MIB, 32 * _MIB)))
    flops = 4 * B * C * i_blk * L * L
    total_bytes = (B * (2 * C * L * L + C * L) + (i_blk + L) * i_blk * L) * isz

    kernel = functools.partial(_flat_kernel, i_blk=i_blk, full_i=(i_blk == L))
    # TODO(synk): pipeline_mode=pl.Buffered(1) on the constant-index e/f specs
    # would free one duplicate VMEM buffer each; left as a sweep knob.
    out_flat = pl.pallas_call(
        kernel,
        out_shape=jax.ShapeDtypeStruct((B, 2, C, L * L), x.dtype),
        grid=(2, B, n_it),        # half axis outermost -> megacore split
        in_specs=[
            pl.BlockSpec((None, C, L), lambda h, b, it: (b, 0, 0)),
            pl.BlockSpec((i_blk, i_blk * L), lambda h, b, it: (0, 0)),
            pl.BlockSpec((L, i_blk * L), lambda h, b, it: (0, 0)),
        ],
        out_specs=pl.BlockSpec((None, None, C, i_blk * L),
                               lambda h, b, it: (b, h, 0, it)),
        scratch_shapes=[pltpu.VMEM((C, i_blk * L), x.dtype)],
        compiler_params=pltpu.CompilerParams(
            # The horz-cache scratch makes the b / it axes order-dependent, so
            # only the half axis is declared parallel.
            dimension_semantics=("parallel", "arbitrary", "arbitrary"),
            vmem_limit_bytes=vmem_limit),
        cost_estimate=pl.CostEstimate(flops=int(flops), transcendentals=0,
                                      bytes_accessed=int(total_bytes)),
    )(x, e_mat, f_mat)
    return out_flat.reshape(B, 2 * C, L, L)


def outer_concatenation_2d(x):
    """x: (B, C, L) float array -> (B, 2C, L, L) pairwise outer concatenation."""
    if x.ndim != 3:
        raise ValueError(
            "Expected three dimensional shape, got shape {}".format(x.shape))
    _, _, L = x.shape
    vmem_cap = _vmem_capacity_bytes()
    # Live-pipeline budget (double buffers included) of ~half the VMEM:
    # ~16 MiB output tiles on v7x (64 MiB cap), larger on v5e/v6e (128 MiB).
    vmem_budget = max(vmem_cap // 2, 8 * _MIB)
    if L % 128 == 0:
        return _dense_call(x, vmem_budget, vmem_cap)    # naturally lane-dense
    out = _flat_call(x, vmem_budget, vmem_cap)          # lane-dense flattened
    if out is not None:
        return out
    # No legal / fitting flat tiling (e.g. L = 300): masked-store dense tiles.
    return _dense_call(x, vmem_budget, vmem_cap)


def outer_concatenation_2d_ref(x):
    B, C, L = x.shape
    vert = jnp.broadcast_to(x[:, :, :, None], (B, C, L, L))   # x[b, c, i] over j
    horz = jnp.broadcast_to(x[:, :, None, :], (B, C, L, L))   # x[b, c, j] over i
    return jnp.concatenate([vert, horz], axis=1)


if __name__ == "__main__":
    key = jax.random.PRNGKey(0)

    # Flat (lane-dense flattened) path: L = 16 is not a multiple of 128.
    B, C, L = 2, 4, 16
    x = jax.random.normal(key, (B, C, L), dtype=jnp.float32)
    out = jax.block_until_ready(outer_concatenation_2d(x))
    ref = outer_concatenation_2d_ref(x)
    assert out.shape == (B, 2 * C, L, L), out.shape
    assert jnp.allclose(out, ref, rtol=1e-5, atol=1e-6), "flat path mismatch"

    # Natural lane-dense 4-D path: L % 128 == 0.
    x2 = jax.random.normal(jax.random.PRNGKey(0), (1, 4, 128), dtype=jnp.float32)
    out2 = jax.block_until_ready(outer_concatenation_2d(x2))
    ref2 = outer_concatenation_2d_ref(x2)
    assert jnp.allclose(out2, ref2, rtol=1e-5, atol=1e-6), "dense path mismatch"

    # Masked-store dense fallback: L = 12 has no lane-dense flat tiling.
    x3 = jax.random.normal(jax.random.PRNGKey(0), (2, 3, 12), dtype=jnp.float32)
    out3 = jax.block_until_ready(outer_concatenation_2d(x3))
    ref3 = outer_concatenation_2d_ref(x3)
    assert jnp.allclose(out3, ref3, rtol=1e-5, atol=1e-6), "fallback mismatch"

    print("KERNEL_OK")
</pallas_src>

<mosaic_0001>
module attributes {stable_mosaic.version = 11 : i64} {
  func.func @_flat_kernel(%arg0: i32, %arg1: i32, %arg2: i32, %arg3: memref<1x4x16xf32, #tpu.memory_space<vmem>>, %arg4: memref<16x256xf32, #tpu.memory_space<vmem>>, %arg5: memref<16x256xf32, #tpu.memory_space<vmem>>, %arg6: memref<1x1x4x256xf32, #tpu.memory_space<vmem>>, %arg7: memref<4x256xf32, #tpu.memory_space<vmem>>) attributes {dimension_semantics = [#tpu.dimension_semantics<parallel>, #tpu.dimension_semantics<arbitrary>, #tpu.dimension_semantics<arbitrary>], iteration_bounds = array<i64: 2, 2, 1>, scalar_prefetch = 0 : i64, scratch_operands = 1 : i64, tpu.core_type = #tpu.core_type<tc>, window_params = [{transform_indices = @transform_0, window_bounds = array<i64: 1, 4, 16>}, {pipeline_mode = #tpu.pipeline_mode<synchronous>, transform_indices = @transform_1, window_bounds = array<i64: 16, 256>}, {pipeline_mode = #tpu.pipeline_mode<synchronous>, transform_indices = @transform_2, window_bounds = array<i64: 16, 256>}, {transform_indices = @transform_3, window_bounds = array<i64: 1, 1, 4, 256>}]} {
    %c0_i32 = arith.constant 0 : i32
    %0 = arith.cmpi eq, %arg0, %c0_i32 : i32
    %1 = arith.extui %0 : i1 to i32
    %c0_i32_0 = arith.constant 0 : i32
    %2 = arith.cmpi ne, %1, %c0_i32_0 : i32
    scf.if %2 {
      %c0 = arith.constant 0 : index
      %c0_2 = arith.constant 0 : index
      %c0_3 = arith.constant 0 : index
      %6 = vector.load %arg3[%c0, %c0_2, %c0_3] : memref<1x4x16xf32, #tpu.memory_space<vmem>>, vector<1x4x16xf32>
      %7 = vector.shape_cast %6 : vector<1x4x16xf32> to vector<4x16xf32>
      %c0_4 = arith.constant 0 : index
      %c0_5 = arith.constant 0 : index
      %8 = vector.load %arg4[%c0_4, %c0_5] : memref<16x256xf32, #tpu.memory_space<vmem>>, vector<16x256xf32>
      %cst = arith.constant dense<0.000000e+00> : vector<4x256xf32>
      %9 = tpu.matmul %7, %8, %cst {dimension_numbers = #tpu.dot_dimension_numbers<[1], [0], [0], [1], [0, 0, 1, 1], [], []>, precision = #tpu.contract_precision<fp32>} : vector<4x16xf32>, vector<16x256xf32>, vector<4x256xf32> -> vector<4x256xf32>
      %c0_6 = arith.constant 0 : index
      %c0_7 = arith.constant 0 : index
      %c0_8 = arith.constant 0 : index
      %c0_9 = arith.constant 0 : index
      %10 = vector.load %arg6[%c0_6, %c0_7, %c0_8, %c0_9] : memref<1x1x4x256xf32, #tpu.memory_space<vmem>>, vector<1x1x4x256xf32>
      %11 = vector.shape_cast %10 : vector<1x1x4x256xf32> to vector<4x256xf32>
      %12 = vector.shape_cast %9 : vector<4x256xf32> to vector<1x1x4x256xf32>
      tpu.vector_store %arg6[%c0_6, %c0_7, %c0_8, %c0_9], %12 {strides = array<i32>} : memref<1x1x4x256xf32, #tpu.memory_space<vmem>>, vector<1x1x4x256xf32>,
    } else {
    }
    %c1_i32 = arith.constant 1 : i32
    %3 = arith.cmpi eq, %arg0, %c1_i32 : i32
    %4 = arith.extui %3 : i1 to i32
    %c0_i32_1 = arith.constant 0 : i32
    %5 = arith.cmpi ne, %4, %c0_i32_1 : i32
    scf.if %5 {
      %c0_i32_2 = arith.constant 0 : i32
      %6 = arith.cmpi eq, %arg2, %c0_i32_2 : i32
      %7 = arith.extui %6 : i1 to i32
      %c0_i32_3 = arith.constant 0 : i32
      %8 = arith.cmpi ne, %7, %c0_i32_3 : i32
      scf.if %8 {
        %c0_9 = arith.constant 0 : index
        %c0_10 = arith.constant 0 : index
        %c0_11 = arith.constant 0 : index
        %13 = vector.load %arg3[%c0_9, %c0_10, %c0_11] : memref<1x4x16xf32, #tpu.memory_space<vmem>>, vector<1x4x16xf32>
        %14 = vector.shape_cast %13 : vector<1x4x16xf32> to vector<4x16xf32>
        %c0_12 = arith.constant 0 : index
        %c0_13 = arith.constant 0 : index
        %15 = vector.load %arg5[%c0_12, %c0_13] : memref<16x256xf32, #tpu.memory_space<vmem>>, vector<16x256xf32>
        %cst = arith.constant dense<0.000000e+00> : vector<4x256xf32>
        %16 = tpu.matmul %14, %15, %cst {dimension_numbers = #tpu.dot_dimension_numbers<[1], [0], [0], [1], [0, 0, 1, 1], [], []>, precision = #tpu.contract_precision<fp32>} : vector<4x16xf32>, vector<16x256xf32>, vector<4x256xf32> -> vector<4x256xf32>
        %c0_14 = arith.constant 0 : index
        %c0_15 = arith.constant 0 : index
        %17 = vector.load %arg7[%c0_14, %c0_15] : memref<4x256xf32, #tpu.memory_space<vmem>>, vector<4x256xf32>
        tpu.vector_store %arg7[%c0_14, %c0_15], %16 {strides = array<i32>} : memref<4x256xf32, #tpu.memory_space<vmem>>, vector<4x256xf32>,
      } else {
      }
      %c0 = arith.constant 0 : index
      %c0_4 = arith.constant 0 : index
      %9 = vector.load %arg7[%c0, %c0_4] : memref<4x256xf32, #tpu.memory_space<vmem>>, vector<4x256xf32>
      %c0_5 = arith.constant 0 : index
      %c0_6 = arith.constant 0 : index
      %c0_7 = arith.constant 0 : index
      %c0_8 = arith.constant 0 : index
      %10 = vector.load %arg6[%c0_5, %c0_6, %c0_7, %c0_8] : memref<1x1x4x256xf32, #tpu.memory_space<vmem>>, vector<1x1x4x256xf32>
      %11 = vector.shape_cast %10 : vector<1x1x4x256xf32> to vector<4x256xf32>
      %12 = vector.shape_cast %9 : vector<4x256xf32> to vector<1x1x4x256xf32>
      tpu.vector_store %arg6[%c0_5, %c0_6, %c0_7, %c0_8], %12 {strides = array<i32>} : memref<1x1x4x256xf32, #tpu.memory_space<vmem>>, vector<1x1x4x256xf32>,
    } else {
    }
    return
  }
  func.func @transform_0(%arg0: i32, %arg1: i32, %arg2: i32) -> (i32, i32, i32) {
    %c0_i32 = arith.constant 0 : i32
    %c0_i32_0 = arith.constant 0 : i32
    %c0_i32_1 = arith.constant 0 : i32
    return %arg1, %c0_i32, %c0_i32_0 : i32, i32, i32
  }
  func.func @transform_1(%arg0: i32, %arg1: i32, %arg2: i32) -> (i32, i32) {
    %c0_i32 = arith.constant 0 : i32
    %c0_i32_0 = arith.constant 0 : i32
    %c0_i32_1 = arith.constant 0 : i32
    return %c0_i32, %c0_i32_0 : i32, i32
  }
  func.func @transform_2(%arg0: i32, %arg1: i32, %arg2: i32) -> (i32, i32) {
    %c0_i32 = arith.constant 0 : i32
    %c0_i32_0 = arith.constant 0 : i32
    %c0_i32_1 = arith.constant 0 : i32
    return %c0_i32, %c0_i32_0 : i32, i32
  }
  func.func @transform_3(%arg0: i32, %arg1: i32, %arg2: i32) -> (i32, i32, i32, i32) {
    %c0_i32 = arith.constant 0 : i32
    %c0_i32_0 = arith.constant 0 : i32
    return %arg1, %arg0, %c0_i32, %arg2 : i32, i32, i32, i32
  }
}

</mosaic_0001>

<llo_original>
// kernel: tpu_custom_call.1
$region0: #{tpu_custom_call.1}
  #allocation0 [shape = 'u32[]', space=smem, size = 0x4, offset = 0x4, fixed_abs, tag = 'smem constant byte address 0x4 - core index']
  #allocation1 [shape = 'u32[144,128]{1,0:T(1,128)}', space=vmem, size = 0x12000, scoped, tag = 'internal scratch']
  #allocation2 [shape = 'f32[4,256]{1,0:T(4,128)}', space=vmem, size = 0x1000, scoped, tag = 'scratch operand']
  %s0 = inlined_call_operand.hbm [shape: f32[2,4,16], index: 0, kind: input, shape index: {}]
  %s1 = inlined_call_operand.hbm [shape: f32[16,256], index: 1, kind: input, shape index: {}]
  %s2 = inlined_call_operand.hbm [shape: f32[16,256], index: 2, kind: input, shape index: {}]
  %s3 = inlined_call_operand.hbm [shape: f32[2,2,4,256], index: 3, kind: output, shape index: {}]
  %s4 = sld [smem:[#allocation0]]
  $region69: #{tpu_custom_call.1} parent=0
    _
  %s6 = ssub.s32 1, %s4
  %s7 = scalar_select 0, %s6, %s4
  $region1: #{tpu_custom_call.1} parent=0
    #allocation3 [shape = 'u8[4096]{0}', space=vmem, size = 0x1000, scoped, tag = 'input window, operand 0']
    #allocation4 [shape = 's32[2]{0}', space=sflag, size = 0x8, scoped, tag = 'scoped memory for tpu_custom_call.1']
    #allocation5 [shape = 's32[2]{0}', space=sflag, size = 0x8, scoped, tag = 'scoped memory for tpu_custom_call.1']
    #allocation6 [shape = 'u8[16384]{0}', space=vmem, size = 0x4000, scoped, tag = 'input window, operand 1, single buffered']
    #allocation7 [shape = 's32[1]{0}', space=sflag, size = 0x4, scoped, tag = 'scoped memory for tpu_custom_call.1']
    #allocation8 [shape = 'u8[16384]{0}', space=vmem, size = 0x4000, scoped, tag = 'input window, operand 2, single buffered']
    #allocation9 [shape = 'u8[8192]{0}', space=vmem, size = 0x2000, scoped, tag = 'output window, operand 0']
    %8 = vsyncpa [#allocation4], 0
    %s9 = scalar_lea.sflag [#allocation4], 1
    %10 = vsyncpa %s9, 0
    %11 = vsyncpa [#allocation7], 0
    %12 = vsyncpa [#allocation5], 0
    %s13 = scalar_lea.sflag [#allocation5], 1
    %14 = vsyncpa %s13, 0
    loop: start=0, step=1, limit=6
    $region2: #{tpu_custom_call.1} parent=1 // loop_pre_header
      _
    $region3: #{tpu_custom_call.1} parent=1 // loop_header
      %s16 = sphi 0, %s20
      %p17 = scmp.ge.s32.totalorder %s16, 6
      %s23 = sphi 0, %s42
      %s24 = sphi 0, %s38
      %s25 = sphi 0, %s34
      %s26 = sphi 0, %s23
      %s27 = sphi 0, %s24
      %s28 = sphi 0, %s25
      %s29 = sphi 0, %s26
      %s30 = sphi 0, %s27
      %s31 = sphi 0, %s28
      %s45 = sphi 0, %s47
      %s48 = sphi 0, %s45
      %s49 = sphi 0, %s48
      %s65 = sphi 0, %s49
      %s69 = sphi 0, %s69
      %s71 = sphi 0, %s69
      %s72 = sphi 0, %s71
      %s86 = sphi 0, %s72
      %s90 = sphi 0, %s90
      %s92 = sphi 0, %s90
      %s93 = sphi 0, %s92
      %s107 = sphi 0, %s93
      %s117 = sphi 0, %s119
      %s120 = sphi 0, %s117
      %s121 = sphi 0, %s120
      %s137 = sphi 0, %s121
    $region4: #{tpu_custom_call.1} parent=1 // loop_header_branch
      %19 = sbr.rel (%p17) target = $region8
    $region5: #{tpu_custom_call.1} parent=1 // loop_body
      %s21 = ssub.s32 %s16, 1
      %s22 = ssub.s32 %s16, 2
      %s32 = sadd.s32 1, %s25
      %p33 = scmp.ge.s32.totalorder %s32, 1
      %s34 = scalar_select %p33, 0, %s32
      %s35 = sadd.s32 1, %s24
      %s36 = scalar_select %p33, %s35, %s24
      %p37 = scmp.ge.s32.totalorder %s36, 2
      %s38 = scalar_select %p37, 0, %s36
      %s39 = sadd.s32 1, %s23
      %s40 = scalar_select %p37, %s39, %s23
      %p41 = scmp.ge.s32.totalorder %s40, 2
      %s42 = scalar_select %p41, 0, %s40
      %s43 = ssub.s32 %s24, %s38
      %p44 = scmp.eq.s32.totalorder %s43, 0
      %s46 = sadd.s32 %s45, 1
      %s47 = scalar_select %p44, %s45, %s46
      %p50 = pneg %p44
      %p51 = scmp.eq.s32.totalorder %s16, 3
      %p52 = por %p50, %p51
      %p53 = scmp.ne.s32.totalorder %s45, %s48
      %p54 = scmp.eq.s32.totalorder %s16, 0
      %p55 = por %p53, %p54
      %p56 = scmp.ne.s32.totalorder %s45, %s48
      %p57 = scmp.eq.s32.totalorder %s21, 3
      %p58 = por %p56, %p57
      %p59 = scmp.ne.s32.totalorder %s48, %s49
      %p60 = scmp.eq.s32.totalorder %s21, 0
      %p61 = por %p59, %p60
      %p62 = scmp.ne.s32.totalorder %s48, %s49
      %p63 = scmp.eq.s32.totalorder %s22, 3
      %p64 = por %p62, %p63
      %p66 = scmp.ne.s32.totalorder %s49, %s65
      %p67 = scmp.eq.s32.totalorder %s22, 0
      %p68 = por %p66, %p67
      %s70 = sadd.s32 %s69, 1
      %p73 = scmp.eq.s32.totalorder %s16, 3
      %p74 = scmp.ne.s32.totalorder %s69, %s71
      %p75 = scmp.eq.s32.totalorder %s16, 0
      %p76 = por %p74, %p75
      %p77 = scmp.ne.s32.totalorder %s69, %s71
      %p78 = scmp.eq.s32.totalorder %s21, 3
      %p79 = por %p77, %p78
      %p80 = scmp.ne.s32.totalorder %s71, %s72
      %p81 = scmp.eq.s32.totalorder %s21, 0
      %p82 = por %p80, %p81
      %p83 = scmp.ne.s32.totalorder %s71, %s72
      %p84 = scmp.eq.s32.totalorder %s22, 3
      %p85 = por %p83, %p84
      %p87 = scmp.ne.s32.totalorder %s72, %s86
      %p88 = scmp.eq.s32.totalorder %s22, 0
      %p89 = por %p87, %p88
      %s91 = sadd.s32 %s90, 1
      %p94 = scmp.eq.s32.totalorder %s16, 3
      %p95 = scmp.ne.s32.totalorder %s90, %s92
      %p96 = scmp.eq.s32.totalorder %s16, 0
      %p97 = por %p95, %p96
      %p98 = scmp.ne.s32.totalorder %s90, %s92
      %p99 = scmp.eq.s32.totalorder %s21, 3
      %p100 = por %p98, %p99
      %p101 = scmp.ne.s32.totalorder %s92, %s93
      %p102 = scmp.eq.s32.totalorder %s21, 0
      %p103 = por %p101, %p102
      %p104 = scmp.ne.s32.totalorder %s92, %s93
      %p105 = scmp.eq.s32.totalorder %s22, 3
      %p106 = por %p104, %p105
      %p108 = scmp.ne.s32.totalorder %s93, %s107
      %p109 = scmp.eq.s32.totalorder %s22, 0
      %p110 = por %p108, %p109
      %s111 = ssub.s32 %s24, %s38
      %s112 = ssub.s32 %s23, %s42
      %s113 = sor.u32 %s111, %s112
      %s114 = ssub.s32 %s25, %s34
      %s115 = sor.u32 %s113, %s114
      %p116 = scmp.eq.s32.totalorder %s115, 0
      %s118 = sadd.s32 %s117, 1
      %s119 = scalar_select %p116, %s117, %s118
      %p122 = pneg %p116
      %p123 = scmp.eq.s32.totalorder %s16, 3
      %p124 = por %p122, %p123
      %p125 = scmp.ne.s32.totalorder %s117, %s120
      %p126 = scmp.eq.s32.totalorder %s16, 0
      %p127 = por %p125, %p126
      %p128 = scmp.ne.s32.totalorder %s117, %s120
      %p129 = scmp.eq.s32.totalorder %s21, 3
      %p130 = por %p128, %p129
      %p131 = scmp.ne.s32.totalorder %s120, %s121
      %p132 = scmp.eq.s32.totalorder %s21, 0
      %p133 = por %p131, %p132
      %p134 = scmp.ne.s32.totalorder %s120, %s121
      %p135 = scmp.eq.s32.totalorder %s22, 3
      %p136 = por %p134, %p135
      %p138 = scmp.ne.s32.totalorder %s121, %s137
      %p139 = scmp.eq.s32.totalorder %s22, 0
      %p140 = por %p138, %p139
      %p141 = scmp.le.s32.totalorder 1, %s16
      %p142 = scmp.lt.s32.totalorder %s16, 5
      %p143 = pnand %p141, %p142
      %p144 = pneg %p143
      // Predicated region
      $region9: #{tpu_custom_call.1} parent=5 // pred_check
        _
      $region10: #{tpu_custom_call.1} parent=5 // pred_check_branch
        %146 = sbr.rel (%p143) target = $region12
      $region11: #{tpu_custom_call.1} parent=5 // pred_region
        %s147 = ssub.s32 %s16, 1
        // Predicated region
        $region13: #{tpu_custom_call.1} parent=11 // pred_check
          %p148 = pneg %p82
        $region14: #{tpu_custom_call.1} parent=11 // pred_check_branch
          %150 = sbr.rel (%p148) target = $region16
        $region15: #{tpu_custom_call.1} parent=11 // pred_region
          %s152 = ssub.s32 512, 512
          %153 = vsyncadd [#allocation7], %s152
          %s154 = sshll.u32 [#allocation6], 4
          %s155 = int_to_ptr.vmem [resolvable:$true] %s154
          %160 = dma.hbm_to_vmem [thread:$0]  %s1, 512, %s155, [#allocation7], 256, 256, 16
        $region16: #{tpu_custom_call.1} parent=11 // pred_fallthru
          _
        // Predicated region
        $region17: #{tpu_custom_call.1} parent=11 // pred_check
          %p161 = pneg %p103
        $region18: #{tpu_custom_call.1} parent=11 // pred_check_branch
          %163 = sbr.rel (%p161) target = $region20
        $region19: #{tpu_custom_call.1} parent=11 // pred_region
          %s165 = ssub.s32 512, 512
          %166 = vsyncadd [#allocation7], %s165
          %s167 = sshll.u32 [#allocation8], 4
          %s168 = int_to_ptr.vmem [resolvable:$true] %s167
          %173 = dma.hbm_to_vmem [thread:$0]  %s2, 512, %s168, [#allocation7], 256, 256, 16
        $region20: #{tpu_custom_call.1} parent=11 // pred_fallthru
          _
      $region12: #{tpu_custom_call.1} parent=5 // pred_fallthru
        _
      %p174 = scmp.lt.s32.totalorder %s16, 4
      // Predicated region
      $region21: #{tpu_custom_call.1} parent=5 // pred_check
        %p175 = pneg %p174
      $region22: #{tpu_custom_call.1} parent=5 // pred_check_branch
        %177 = sbr.rel (%p175) target = $region24
      $region23: #{tpu_custom_call.1} parent=5 // pred_region
        // Predicated region
        $region25: #{tpu_custom_call.1} parent=23 // pred_check
          %p178 = pneg %p55
        $region26: #{tpu_custom_call.1} parent=23 // pred_check_branch
          %180 = sbr.rel (%p178) target = $region28
        $region27: #{tpu_custom_call.1} parent=23 // pred_region
          %s181 = sand.u32 %s45, 1
          %s182 = scalar_lea.sflag [#allocation4], %s181
          %s183 = sand.u32 %s45, 1
          %s184 = smul.addr %s183, 4
          %s185 = scalar_lea.vmem [#allocation3], %s184
          %s187 = ssub.s32 64, 64
          %188 = vsyncadd %s182, %s187
          %s189 = smul.addr %s24, 64
          %s190 = scalar_lea.hbm %s0, %s189
          %s192 = sshll.u32 %s185, 4
          %s193 = int_to_ptr.vmem [resolvable:$true] %s192
          %195 = dma.hbm_to_vmem [thread:$0]  %s190, 64, %s193, %s182
        $region28: #{tpu_custom_call.1} parent=23 // pred_fallthru
          _
      $region24: #{tpu_custom_call.1} parent=5 // pred_fallthru
        _
      %p196 = scmp.le.s32.totalorder 1, %s16
      %p197 = scmp.lt.s32.totalorder %s16, 5
      %p198 = pnand %p196, %p197
      %p199 = pneg %p198
      // Predicated region
      $region29: #{tpu_custom_call.1} parent=5 // pred_check
        _
      $region30: #{tpu_custom_call.1} parent=5 // pred_check_branch
        %201 = sbr.rel (%p198) target = $region32
      $region31: #{tpu_custom_call.1} parent=5 // pred_region
        %s202 = ssub.s32 %s16, 1
        %s203 = sand.u32 %s48, 1
        %s204 = scalar_lea.sflag [#allocation4], %s203
        %s205 = sand.u32 %s48, 1
        %s206 = smul.addr %s205, 4
        %s207 = scalar_lea.vmem [#allocation3], %s206
        // Predicated region
        $region33: #{tpu_custom_call.1} parent=31 // pred_check
          %p208 = pneg %p61
        $region34: #{tpu_custom_call.1} parent=31 // pred_check_branch
          %210 = sbr.rel (%p208) target = $region36
        $region35: #{tpu_custom_call.1} parent=31 // pred_region
          %211 = dma.done %s204, 64
        $region36: #{tpu_custom_call.1} parent=31 // pred_fallthru
          _
        // Predicated region
        $region37: #{tpu_custom_call.1} parent=31 // pred_check
          %p212 = pneg %p82
        $region38: #{tpu_custom_call.1} parent=31 // pred_check_branch
          %214 = sbr.rel (%p212) target = $region40
        $region39: #{tpu_custom_call.1} parent=31 // pred_region
          %215 = dma.done [#allocation7], 512
        $region40: #{tpu_custom_call.1} parent=31 // pred_fallthru
          _
        // Predicated region
        $region41: #{tpu_custom_call.1} parent=31 // pred_check
          %p216 = pneg %p103
        $region42: #{tpu_custom_call.1} parent=31 // pred_check_branch
          %218 = sbr.rel (%p216) target = $region44
        $region43: #{tpu_custom_call.1} parent=31 // pred_region
          %219 = dma.done [#allocation7], 512
        $region44: #{tpu_custom_call.1} parent=31 // pred_fallthru
          _
        %s220 = sand.u32 %s48, 1
        %s221 = scalar_lea.sflag [#allocation4], %s220
        %s222 = sand.u32 %s48, 1
        %s223 = smul.addr %s222, 4
        %s224 = scalar_lea.vmem [#allocation3], %s223
        %p225 = pneg %p61
        %p226 = pneg %p58
        %p227 = pneg %p82
        %p228 = pneg %p79
        %p229 = pneg %p103
        %p230 = pneg %p100
        %p231 = pneg %p133
        %p232 = pneg %p130
        %s233 = sand.u32 %s120, 1
        %s234 = scalar_lea.sflag [#allocation5], %s233
        %s235 = sand.u32 %s120, 1
        %s236 = smul.addr %s235, 8
        %s237 = scalar_lea.vmem [#allocation9], %s236
        %s238 = smul.u32 2, %s28
        %p239 = scmp.eq.s32.totalorder %s26, 0
        // Predicated region
        $region45: #{tpu_custom_call.1} parent=31 // pred_check
          %p240 = pneg %p239
        $region46: #{tpu_custom_call.1} parent=31 // pred_check_branch
          %242 = sbr.rel (%p240) target = $region48
        $region47: #{tpu_custom_call.1} parent=31 // pred_region
          %v243 = vld [vmem:[%s207] sm:$0xf]
          %v244 = vld [vmem:[#allocation6] sm:$0xff]
          %v245 = vld [vmem:[#allocation6 + $0x8] sm:$0xff]
          %v246 = vld [vmem:[#allocation6 + $0x10] sm:$0xff]
          %v247 = vld [vmem:[#allocation6 + $0x18] sm:$0xff]
          %vm248 = vcmask 130048
          %v250 = vsel %vm248, %v243, 0
          %v252 = vand.u32 %v245, 4294901760
          %253 = vmatprep.subr.mxu0 %v252
          %v254 = vand.u32 %v244, 4294901760
          %255 = vmatpush1.msra.mxu0 %v254
          %v256 = vand.u32 %v247, 4294901760
          %257 = vmatprep.subr.mxu0 %v256
          %v258 = vand.u32 %v246, 4294901760
          %259 = vmatpush1.msra.mxu0 %v258
          %260 = vmatprep.subr.mxu0 0.0
          %261 = vmatpush1.msra.mxu0 0.0
          %262 = vmatprep.subr.mxu0 0.0
          %263 = vmatpush1.msra.mxu0 0.0
          %264 = vmatprep.subr.mxu0 0.0
          %265 = vmatpush1.msra.mxu0 0.0
          %266 = vmatprep.subr.mxu0 0.0
          %267 = vmatpush1.msra.mxu0 0.0
          %268 = vmatprep.subr.mxu0 0.0
          %269 = vmatpush1.msra.mxu0 0.0
          %270 = vmatprep.subr.mxu0 0.0
          %271 = vmatpush1.msra.mxu0 0.0
          %272 = vmatprep.subr.mxu0 0.0
          %273 = vmatpush1.msra.mxu0 0.0
          %274 = vmatprep.subr.mxu0 0.0
          %275 = vmatpush1.msra.mxu0 0.0
          %276 = vmatprep.subr.mxu0 0.0
          %277 = vmatpush1.msra.mxu0 0.0
          %278 = vmatprep.subr.mxu0 0.0
          %279 = vmatpush1.msra.mxu0 0.0
          %280 = vmatprep.subr.mxu0 0.0
          %281 = vmatpush1.msra.mxu0 0.0
          %282 = vmatprep.subr.mxu0 0.0
          %283 = vmatpush1.msra.mxu0 0.0
          %284 = vmatprep.subr.mxu0 0.0
          %285 = vmatpush1.msra.mxu0 0.0
          %286 = vmatprep.subr.mxu0 0.0
          %287 = vmatpush1.msra.mxu0 0.0
          %288 = vmatprep.subr.mxu0 0.0
          %289 = vmatpush1.msra.mxu0 0.0
          %290 = vmatprep.subr.mxu0 0.0
          %291 = vmatpush1.msra.mxu0 0.0
          %292 = vmatprep.subr.mxu0 0.0
          %293 = vmatpush1.msra.mxu0 0.0
          %294 = vmatprep.subr.mxu0 0.0
          %295 = vmatpush1.msra.mxu0 0.0
          %296 = vmatprep.subr.mxu0 0.0
          %297 = vmatpush1.msra.mxu0 0.0
          %298 = vmatprep.subr.mxu0 0.0
          %299 = vmatpush1.msra.mxu0 0.0
          %300 = vmatprep.subr.mxu0 0.0
          %301 = vmatpush1.msra.mxu0 0.0
          %302 = vmatprep.subr.mxu0 0.0
          %303 = vmatpush1.msra.mxu0 0.0
          %304 = vmatprep.subr.mxu0 0.0
          %305 = vmatpush1.msra.mxu0 0.0
          %306 = vmatprep.subr.mxu0 0.0
          %307 = vmatpush1.msra.mxu0 0.0
          %308 = vmatprep.subr.mxu0 0.0
          %309 = vmatpush1.msra.mxu0 0.0
          %310 = vmatprep.subr.mxu0 0.0
          %311 = vmatpush1.msra.mxu0 0.0
          %312 = vmatprep.subr.mxu0 0.0
          %313 = vmatpush1.msra.mxu0 0.0
          %314 = vmatprep.subr.mxu0 0.0
          %315 = vmatpush1.msra.mxu0 0.0
          %316 = vmatprep.subr.mxu0 0.0
          %317 = vmatpush1.msra.mxu0 0.0
          %318 = vmatprep.subr.mxu0 0.0
          %319 = vmatpush1.msra.mxu0 0.0
          %320 = vmatprep.mubr.f32.mxu0 0.0
          %v321 = vand.u32 %v250, 4294901760
          %v322 = vsub.f32 %v250, %v321
          %v323 = vand.u32 %v322, 4294901760
          %v324 = vsub.f32 %v322, %v323
          %v325 = vand.u32 %v324, 4294901760
          %326 = vmatmul.mubr.f32.gmra.mrb[0].mxu0 %v325
          %v327 = vpop.f32.mrb[0].mxu0
          %v328 = vadd.f32 0.0, %v327
          %v329 = vpop.f32.mrb[0].mxu0
          %v330 = vadd.f32 0.0, %v329
          %331 = vdwg.mxu0
          %v332 = vand.u32 %v245, 4294901760
          %v333 = vsub.f32 %v245, %v332
          %v334 = vand.u32 %v333, 4294901760
          %v335 = vsub.f32 %v333, %v334
          %v336 = vand.u32 %v335, 4294901760
          %337 = vmatprep.subr.mxu0 %v336
          %v338 = vand.u32 %v244, 4294901760
          %v339 = vsub.f32 %v244, %v338
          %v340 = vand.u32 %v339, 4294901760
          %v341 = vsub.f32 %v339, %v340
          %v342 = vand.u32 %v341, 4294901760
          %343 = vmatpush1.msra.mxu0 %v342
          %v344 = vand.u32 %v247, 4294901760
          %v345 = vsub.f32 %v247, %v344
          %v346 = vand.u32 %v345, 4294901760
          %v347 = vsub.f32 %v345, %v346
          %v348 = vand.u32 %v347, 4294901760
          %349 = vmatprep.subr.mxu0 %v348
          %v350 = vand.u32 %v246, 4294901760
          %v351 = vsub.f32 %v246, %v350
          %v352 = vand.u32 %v351, 4294901760
          %v353 = vsub.f32 %v351, %v352
          %v354 = vand.u32 %v353, 4294901760
          %355 = vmatpush1.msra.mxu0 %v354
          %356 = vmatprep.subr.mxu0 0.0
          %357 = vmatpush1.msra.mxu0 0.0
          %358 = vmatprep.subr.mxu0 0.0
          %359 = vmatpush1.msra.mxu0 0.0
          %360 = vmatprep.subr.mxu0 0.0
          %361 = vmatpush1.msra.mxu0 0.0
          %362 = vmatprep.subr.mxu0 0.0
          %363 = vmatpush1.msra.mxu0 0.0
          %364 = vmatprep.subr.mxu0 0.0
          %365 = vmatpush1.msra.mxu0 0.0
          %366 = vmatprep.subr.mxu0 0.0
          %367 = vmatpush1.msra.mxu0 0.0
          %368 = vmatprep.subr.mxu0 0.0
          %369 = vmatpush1.msra.mxu0 0.0
          %370 = vmatprep.subr.mxu0 0.0
          %371 = vmatpush1.msra.mxu0 0.0
          %372 = vmatprep.subr.mxu0 0.0
          %373 = vmatpush1.msra.mxu0 0.0
          %374 = vmatprep.subr.mxu0 0.0
          %375 = vmatpush1.msra.mxu0 0.0
          %376 = vmatprep.subr.mxu0 0.0
          %377 = vmatpush1.msra.mxu0 0.0
          %378 = vmatprep.subr.mxu0 0.0
          %379 = vmatpush1.msra.mxu0 0.0
          %380 = vmatprep.subr.mxu0 0.0
          %381 = vmatpush1.msra.mxu0 0.0
          %382 = vmatprep.subr.mxu0 0.0
          %383 = vmatpush1.msra.mxu0 0.0
          %384 = vmatprep.subr.mxu0 0.0
          %385 = vmatpush1.msra.mxu0 0.0
          %386 = vmatprep.subr.mxu0 0.0
          %387 = vmatpush1.msra.mxu0 0.0
          %388 = vmatprep.subr.mxu0 0.0
          %389 = vmatpush1.msra.mxu0 0.0
          %390 = vmatprep.subr.mxu0 0.0
          %391 = vmatpush1.msra.mxu0 0.0
          %392 = vmatprep.subr.mxu0 0.0
          %393 = vmatpush1.msra.mxu0 0.0
          %394 = vmatprep.subr.mxu0 0.0
          %395 = vmatpush1.msra.mxu0 0.0
          %396 = vmatprep.subr.mxu0 0.0
          %397 = vmatpush1.msra.mxu0 0.0
          %398 = vmatprep.subr.mxu0 0.0
          %399 = vmatpush1.msra.mxu0 0.0
          %400 = vmatprep.subr.mxu0 0.0
          %401 = vmatpush1.msra.mxu0 0.0
          %402 = vmatprep.subr.mxu0 0.0
          %403 = vmatpush1.msra.mxu0 0.0
          %404 = vmatprep.subr.mxu0 0.0
          %405 = vmatpush1.msra.mxu0 0.0
          %406 = vmatprep.subr.mxu0 0.0
          %407 = vmatpush1.msra.mxu0 0.0
          %408 = vmatprep.subr.mxu0 0.0
          %409 = vmatpush1.msra.mxu0 0.0
          %410 = vmatprep.subr.mxu0 0.0
          %411 = vmatpush1.msra.mxu0 0.0
          %412 = vmatprep.subr.mxu0 0.0
          %413 = vmatpush1.msra.mxu0 0.0
          %414 = vmatprep.subr.mxu0 0.0
          %415 = vmatpush1.msra.mxu0 0.0
          %416 = vmatprep.mubr.f32.mxu0 0.0
          %v417 = vand.u32 %v250, 4294901760
          %418 = vmatmul.mubr.f32.gmra.mrb[0].mxu0 %v417
          %v419 = vpop.f32.mrb[0].mxu0
          %v420 = vadd.f32 %v328, %v419
          %v421 = vpop.f32.mrb[0].mxu0
          %v422 = vadd.f32 %v330, %v421
          %423 = vdwg.mxu0
          %v424 = vand.u32 %v245, 4294901760
          %v425 = vsub.f32 %v245, %v424
          %426 = vmatprep.subr.mxu0 %v425
          %v427 = vand.u32 %v244, 4294901760
          %v428 = vsub.f32 %v244, %v427
          %429 = vmatpush1.msra.mxu0 %v428
          %v430 = vand.u32 %v247, 4294901760
          %v431 = vsub.f32 %v247, %v430
          %432 = vmatprep.subr.mxu0 %v431
          %v433 = vand.u32 %v246, 4294901760
          %v434 = vsub.f32 %v246, %v433
          %435 = vmatpush1.msra.mxu0 %v434
          %436 = vmatprep.subr.mxu0 0.0
          %437 = vmatpush1.msra.mxu0 0.0
          %438 = vmatprep.subr.mxu0 0.0
          %439 = vmatpush1.msra.mxu0 0.0
          %440 = vmatprep.subr.mxu0 0.0
          %441 = vmatpush1.msra.mxu0 0.0
          %442 = vmatprep.subr.mxu0 0.0
          %443 = vmatpush1.msra.mxu0 0.0
          %444 = vmatprep.subr.mxu0 0.0
          %445 = vmatpush1.msra.mxu0 0.0
          %446 = vmatprep.subr.mxu0 0.0
          %447 = vmatpush1.msra.mxu0 0.0
          %448 = vmatprep.subr.mxu0 0.0
          %449 = vmatpush1.msra.mxu0 0.0
          %450 = vmatprep.subr.mxu0 0.0
          %451 = vmatpush1.msra.mxu0 0.0
          %452 = vmatprep.subr.mxu0 0.0
          %453 = vmatpush1.msra.mxu0 0.0
          %454 = vmatprep.subr.mxu0 0.0
          %455 = vmatpush1.msra.mxu0 0.0
          %456 = vmatprep.subr.mxu0 0.0
          %457 = vmatpush1.msra.mxu0 0.0
          %458 = vmatprep.subr.mxu0 0.0
          %459 = vmatpush1.msra.mxu0 0.0
          %460 = vmatprep.subr.mxu0 0.0
          %461 = vmatpush1.msra.mxu0 0.0
          %462 = vmatprep.subr.mxu0 0.0
          %463 = vmatpush1.msra.mxu0 0.0
          %464 = vmatprep.subr.mxu0 0.0
          %465 = vmatpush1.msra.mxu0 0.0
          %466 = vmatprep.subr.mxu0 0.0
          %467 = vmatpush1.msra.mxu0 0.0
          %468 = vmatprep.subr.mxu0 0.0
          %469 = vmatpush1.msra.mxu0 0.0
          %470 = vmatprep.subr.mxu0 0.0
          %471 = vmatpush1.msra.mxu0 0.0
          %472 = vmatprep.subr.mxu0 0.0
          %473 = vmatpush1.msra.mxu0 0.0
          %474 = vmatprep.subr.mxu0 0.0
          %475 = vmatpush1.msra.mxu0 0.0
          %476 = vmatprep.subr.mxu0 0.0
          %477 = vmatpush1.msra.mxu0 0.0
          %478 = vmatprep.subr.mxu0 0.0
          %479 = vmatpush1.msra.mxu0 0.0
          %480 = vmatprep.subr.mxu0 0.0
          %481 = vmatpush1.msra.mxu0 0.0
          %482 = vmatprep.subr.mxu0 0.0
          %483 = vmatpush1.msra.mxu0 0.0
          %484 = vmatprep.subr.mxu0 0.0
          %485 = vmatpush1.msra.mxu0 0.0
          %486 = vmatprep.subr.mxu0 0.0
          %487 = vmatpush1.msra.mxu0 0.0
          %488 = vmatprep.subr.mxu0 0.0
          %489 = vmatpush1.msra.mxu0 0.0
          %490 = vmatprep.subr.mxu0 0.0
          %491 = vmatpush1.msra.mxu0 0.0
          %492 = vmatprep.subr.mxu0 0.0
          %493 = vmatpush1.msra.mxu0 0.0
          %494 = vmatprep.subr.mxu0 0.0
          %495 = vmatpush1.msra.mxu0 0.0
          %496 = vmatprep.mubr.f32.mxu0 0.0
          %v497 = vand.u32 %v250, 4294901760
          %v498 = vsub.f32 %v250, %v497
          %499 = vmatmul.mubr.f32.gmra.mrb[0].mxu0 %v498
          %v500 = vpop.f32.mrb[0].mxu0
          %v501 = vadd.f32 %v420, %v500
          %v502 = vpop.f32.mrb[0].mxu0
          %v503 = vadd.f32 %v422, %v502
          %504 = vdwg.mxu0
          %v505 = vand.u32 %v245, 4294901760
          %506 = vmatprep.subr.mxu0 %v505
          %v507 = vand.u32 %v244, 4294901760
          %508 = vmatpush1.msra.mxu0 %v507
          %v509 = vand.u32 %v247, 4294901760
          %510 = vmatprep.subr.mxu0 %v509
          %v511 = vand.u32 %v246, 4294901760
          %512 = vmatpush1.msra.mxu0 %v511
          %513 = vmatprep.subr.mxu0 0.0
          %514 = vmatpush1.msra.mxu0 0.0
          %515 = vmatprep.subr.mxu0 0.0
          %516 = vmatpush1.msra.mxu0 0.0
          %517 = vmatprep.subr.mxu0 0.0
          %518 = vmatpush1.msra.mxu0 0.0
          %519 = vmatprep.subr.mxu0 0.0
          %520 = vmatpush1.msra.mxu0 0.0
          %521 = vmatprep.subr.mxu0 0.0
          %522 = vmatpush1.msra.mxu0 0.0
          %523 = vmatprep.subr.mxu0 0.0
          %524 = vmatpush1.msra.mxu0 0.0
          %525 = vmatprep.subr.mxu0 0.0
          %526 = vmatpush1.msra.mxu0 0.0
          %527 = vmatprep.subr.mxu0 0.0
          %528 = vmatpush1.msra.mxu0 0.0
          %529 = vmatprep.subr.mxu0 0.0
          %530 = vmatpush1.msra.mxu0 0.0
          %531 = vmatprep.subr.mxu0 0.0
          %532 = vmatpush1.msra.mxu0 0.0
          %533 = vmatprep.subr.mxu0 0.0
          %534 = vmatpush1.msra.mxu0 0.0
          %535 = vmatprep.subr.mxu0 0.0
          %536 = vmatpush1.msra.mxu0 0.0
          %537 = vmatprep.subr.mxu0 0.0
          %538 = vmatpush1.msra.mxu0 0.0
          %539 = vmatprep.subr.mxu0 0.0
          %540 = vmatpush1.msra.mxu0 0.0
          %541 = vmatprep.subr.mxu0 0.0
          %542 = vmatpush1.msra.mxu0 0.0
          %543 = vmatprep.subr.mxu0 0.0
          %544 = vmatpush1.msra.mxu0 0.0
          %545 = vmatprep.subr.mxu0 0.0
          %546 = vmatpush1.msra.mxu0 0.0
          %547 = vmatprep.subr.mxu0 0.0
          %548 = vmatpush1.msra.mxu0 0.0
          %549 = vmatprep.subr.mxu0 0.0
          %550 = vmatpush1.msra.mxu0 0.0
          %551 = vmatprep.subr.mxu0 0.0
          %552 = vmatpush1.msra.mxu0 0.0
          %553 = vmatprep.subr.mxu0 0.0
          %554 = vmatpush1.msra.mxu0 0.0
          %555 = vmatprep.subr.mxu0 0.0
          %556 = vmatpush1.msra.mxu0 0.0
          %557 = vmatprep.subr.mxu0 0.0
          %558 = vmatpush1.msra.mxu0 0.0
          %559 = vmatprep.subr.mxu0 0.0
          %560 = vmatpush1.msra.mxu0 0.0
          %561 = vmatprep.subr.mxu0 0.0
          %562 = vmatpush1.msra.mxu0 0.0
          %563 = vmatprep.subr.mxu0 0.0
          %564 = vmatpush1.msra.mxu0 0.0
          %565 = vmatprep.subr.mxu0 0.0
          %566 = vmatpush1.msra.mxu0 0.0
          %567 = vmatprep.subr.mxu0 0.0
          %568 = vmatpush1.msra.mxu0 0.0
          %569 = vmatprep.subr.mxu0 0.0
          %570 = vmatpush1.msra.mxu0 0.0
          %571 = vmatprep.subr.mxu0 0.0
          %572 = vmatpush1.msra.mxu0 0.0
          %573 = vmatprep.mubr.f32.mxu0 0.0
          %v574 = vand.u32 %v250, 4294901760
          %v575 = vsub.f32 %v250, %v574
          %v576 = vand.u32 %v575, 4294901760
          %577 = vmatmul.mubr.f32.gmra.mrb[0].mxu0 %v576
          %v578 = vpop.f32.mrb[0].mxu0
          %v579 = vadd.f32 %v501, %v578
          %v580 = vpop.f32.mrb[0].mxu0
          %v581 = vadd.f32 %v503, %v580
          %582 = vdwg.mxu0
          %v583 = vand.u32 %v245, 4294901760
          %v584 = vsub.f32 %v245, %v583
          %v585 = vand.u32 %v584, 4294901760
          %586 = vmatprep.subr.mxu0 %v585
          %v587 = vand.u32 %v244, 4294901760
          %v588 = vsub.f32 %v244, %v587
          %v589 = vand.u32 %v588, 4294901760
          %590 = vmatpush1.msra.mxu0 %v589
          %v591 = vand.u32 %v247, 4294901760
          %v592 = vsub.f32 %v247, %v591
          %v593 = vand.u32 %v592, 4294901760
          %594 = vmatprep.subr.mxu0 %v593
          %v595 = vand.u32 %v246, 4294901760
          %v596 = vsub.f32 %v246, %v595
          %v597 = vand.u32 %v596, 4294901760
          %598 = vmatpush1.msra.mxu0 %v597
          %599 = vmatprep.subr.mxu0 0.0
          %600 = vmatpush1.msra.mxu0 0.0
          %601 = vmatprep.subr.mxu0 0.0
          %602 = vmatpush1.msra.mxu0 0.0
          %603 = vmatprep.subr.mxu0 0.0
          %604 = vmatpush1.msra.mxu0 0.0
          %605 = vmatprep.subr.mxu0 0.0
          %606 = vmatpush1.msra.mxu0 0.0
          %607 = vmatprep.subr.mxu0 0.0
          %608 = vmatpush1.msra.mxu0 0.0
          %609 = vmatprep.subr.mxu0 0.0
          %610 = vmatpush1.msra.mxu0 0.0
          %611 = vmatprep.subr.mxu0 0.0
          %612 = vmatpush1.msra.mxu0 0.0
          %613 = vmatprep.subr.mxu0 0.0
          %614 = vmatpush1.msra.mxu0 0.0
          %615 = vmatprep.subr.mxu0 0.0
          %616 = vmatpush1.msra.mxu0 0.0
          %617 = vmatprep.subr.mxu0 0.0
          %618 = vmatpush1.msra.mxu0 0.0
          %619 = vmatprep.subr.mxu0 0.0
          %620 = vmatpush1.msra.mxu0 0.0
          %621 = vmatprep.subr.mxu0 0.0
          %622 = vmatpush1.msra.mxu0 0.0
          %623 = vmatprep.subr.mxu0 0.0
          %624 = vmatpush1.msra.mxu0 0.0
          %625 = vmatprep.subr.mxu0 0.0
          %626 = vmatpush1.msra.mxu0 0.0
          %627 = vmatprep.subr.mxu0 0.0
          %628 = vmatpush1.msra.mxu0 0.0
          %629 = vmatprep.subr.mxu0 0.0
          %630 = vmatpush1.msra.mxu0 0.0
          %631 = vmatprep.subr.mxu0 0.0
          %632 = vmatpush1.msra.mxu0 0.0
          %633 = vmatprep.subr.mxu0 0.0
          %634 = vmatpush1.msra.mxu0 0.0
          %635 = vmatprep.subr.mxu0 0.0
          %636 = vmatpush1.msra.mxu0 0.0
          %637 = vmatprep.subr.mxu0 0.0
          %638 = vmatpush1.msra.mxu0 0.0
          %639 = vmatprep.subr.mxu0 0.0
          %640 = vmatpush1.msra.mxu0 0.0
          %641 = vmatprep.subr.mxu0 0.0
          %642 = vmatpush1.msra.mxu0 0.0
          %643 = vmatprep.subr.mxu0 0.0
          %644 = vmatpush1.msra.mxu0 0.0
          %645 = vmatprep.subr.mxu0 0.0
          %646 = vmatpush1.msra.mxu0 0.0
          %647 = vmatprep.subr.mxu0 0.0
          %648 = vmatpush1.msra.mxu0 0.0
          %649 = vmatprep.subr.mxu0 0.0
          %650 = vmatpush1.msra.mxu0 0.0
          %651 = vmatprep.subr.mxu0 0.0
          %652 = vmatpush1.msra.mxu0 0.0
          %653 = vmatprep.subr.mxu0 0.0
          %654 = vmatpush1.msra.mxu0 0.0
          %655 = vmatprep.subr.mxu0 0.0
          %656 = vmatpush1.msra.mxu0 0.0
          %657 = vmatprep.subr.mxu0 0.0
          %658 = vmatpush1.msra.mxu0 0.0
          %659 = vmatprep.mubr.f32.mxu0 0.0
          %v660 = vand.u32 %v250, 4294901760
          %661 = vmatmul.mubr.f32.gmra.mrb[0].mxu0 %v660
          %v662 = vpop.f32.mrb[0].mxu0
          %v663 = vadd.f32 %v579, %v662
          %v664 = vpop.f32.mrb[0].mxu0
          %v665 = vadd.f32 %v581, %v664
          %666 = vdwg.mxu0
          %v667 = vand.u32 %v245, 4294901760
          %668 = vmatprep.subr.mxu0 %v667
          %v669 = vand.u32 %v244, 4294901760
          %670 = vmatpush1.msra.mxu0 %v669
          %v671 = vand.u32 %v247, 4294901760
          %672 = vmatprep.subr.mxu0 %v671
          %v673 = vand.u32 %v246, 4294901760
          %674 = vmatpush1.msra.mxu0 %v673
          %675 = vmatprep.subr.mxu0 0.0
          %676 = vmatpush1.msra.mxu0 0.0
          %677 = vmatprep.subr.mxu0 0.0
          %678 = vmatpush1.msra.mxu0 0.0
          %679 = vmatprep.subr.mxu0 0.0
          %680 = vmatpush1.msra.mxu0 0.0
          %681 = vmatprep.subr.mxu0 0.0
          %682 = vmatpush1.msra.mxu0 0.0
          %683 = vmatprep.subr.mxu0 0.0
          %684 = vmatpush1.msra.mxu0 0.0
          %685 = vmatprep.subr.mxu0 0.0
          %686 = vmatpush1.msra.mxu0 0.0
          %687 = vmatprep.subr.mxu0 0.0
          %688 = vmatpush1.msra.mxu0 0.0
          %689 = vmatprep.subr.mxu0 0.0
          %690 = vmatpush1.msra.mxu0 0.0
          %691 = vmatprep.subr.mxu0 0.0
          %692 = vmatpush1.msra.mxu0 0.0
          %693 = vmatprep.subr.mxu0 0.0
          %694 = vmatpush1.msra.mxu0 0.0
          %695 = vmatprep.subr.mxu0 0.0
          %696 = vmatpush1.msra.mxu0 0.0
          %697 = vmatprep.subr.mxu0 0.0
          %698 = vmatpush1.msra.mxu0 0.0
          %699 = vmatprep.subr.mxu0 0.0
          %700 = vmatpush1.msra.mxu0 0.0
          %701 = vmatprep.subr.mxu0 0.0
          %702 = vmatpush1.msra.mxu0 0.0
          %703 = vmatprep.subr.mxu0 0.0
          %704 = vmatpush1.msra.mxu0 0.0
          %705 = vmatprep.subr.mxu0 0.0
          %706 = vmatpush1.msra.mxu0 0.0
          %707 = vmatprep.subr.mxu0 0.0
          %708 = vmatpush1.msra.mxu0 0.0
          %709 = vmatprep.subr.mxu0 0.0
          %710 = vmatpush1.msra.mxu0 0.0
          %711 = vmatprep.subr.mxu0 0.0
          %712 = vmatpush1.msra.mxu0 0.0
          %713 = vmatprep.subr.mxu0 0.0
          %714 = vmatpush1.msra.mxu0 0.0
          %715 = vmatprep.subr.mxu0 0.0
          %716 = vmatpush1.msra.mxu0 0.0
          %717 = vmatprep.subr.mxu0 0.0
          %718 = vmatpush1.msra.mxu0 0.0
          %719 = vmatprep.subr.mxu0 0.0
          %720 = vmatpush1.msra.mxu0 0.0
          %721 = vmatprep.subr.mxu0 0.0
          %722 = vmatpush1.msra.mxu0 0.0
          %723 = vmatprep.subr.mxu0 0.0
          %724 = vmatpush1.msra.mxu0 0.0
          %725 = vmatprep.subr.mxu0 0.0
          %726 = vmatpush1.msra.mxu0 0.0
          %727 = vmatprep.subr.mxu0 0.0
          %728 = vmatpush1.msra.mxu0 0.0
          %729 = vmatprep.subr.mxu0 0.0
          %730 = vmatpush1.msra.mxu0 0.0
          %731 = vmatprep.subr.mxu0 0.0
          %732 = vmatpush1.msra.mxu0 0.0
          %733 = vmatprep.subr.mxu0 0.0
          %734 = vmatpush1.msra.mxu0 0.0
          %735 = vmatprep.mubr.f32.mxu0 0.0
          %v736 = vand.u32 %v250, 4294901760
          %737 = vmatmul.mubr.f32.gmra.mrb[0].mxu0 %v736
          %v738 = vpop.f32.mrb[0].mxu0
          %v739 = vadd.f32 %v663, %v738
          %v740 = vpop.f32.mrb[0].mxu0
          %v741 = vadd.f32 %v665, %v740
          %742 = vdwg.mxu0
          %v745 = vcombine.low %v739, %v741
          %747 = vst [vmem:[%s237] sm:$0xff] %v745
        $region48: #{tpu_custom_call.1} parent=31 // pred_fallthru
          _
        %p748 = scmp.eq.s32.totalorder %s26, 1
        // Predicated region
        $region49: #{tpu_custom_call.1} parent=31 // pred_check
          %p749 = pneg %p748
        $region50: #{tpu_custom_call.1} parent=31 // pred_check_branch
          %751 = sbr.rel (%p749) target = $region52
        $region51: #{tpu_custom_call.1} parent=31 // pred_region
          %p752 = scmp.eq.s32.totalorder %s28, 0
          // Predicated region
          $region53: #{tpu_custom_call.1} parent=51 // pred_check
            %p753 = pneg %p752
          $region54: #{tpu_custom_call.1} parent=51 // pred_check_branch
            %755 = sbr.rel (%p753) target = $region56
          $region55: #{tpu_custom_call.1} parent=51 // pred_region
            %v756 = vld [vmem:[%s207] sm:$0xf]
            %v757 = vld [vmem:[#allocation8] sm:$0xff]
            %v758 = vld [vmem:[#allocation8 + $0x8] sm:$0xff]
            %v759 = vld [vmem:[#allocation8 + $0x10] sm:$0xff]
            %v760 = vld [vmem:[#allocation8 + $0x18] sm:$0xff]
            %vm761 = vcmask 130048
            %v763 = vsel %vm761, %v756, 0
            %v765 = vand.u32 %v758, 4294901760
            %766 = vmatprep.subr.mxu0 %v765
            %v767 = vand.u32 %v757, 4294901760
            %768 = vmatpush1.msra.mxu0 %v767
            %v769 = vand.u32 %v760, 4294901760
            %770 = vmatprep.subr.mxu0 %v769
            %v771 = vand.u32 %v759, 4294901760
            %772 = vmatpush1.msra.mxu0 %v771
            %773 = vmatprep.subr.mxu0 0.0
            %774 = vmatpush1.msra.mxu0 0.0
            %775 = vmatprep.subr.mxu0 0.0
            %776 = vmatpush1.msra.mxu0 0.0
            %777 = vmatprep.subr.mxu0 0.0
            %778 = vmatpush1.msra.mxu0 0.0
            %779 = vmatprep.subr.mxu0 0.0
            %780 = vmatpush1.msra.mxu0 0.0
            %781 = vmatprep.subr.mxu0 0.0
            %782 = vmatpush1.msra.mxu0 0.0
            %783 = vmatprep.subr.mxu0 0.0
            %784 = vmatpush1.msra.mxu0 0.0
            %785 = vmatprep.subr.mxu0 0.0
            %786 = vmatpush1.msra.mxu0 0.0
            %787 = vmatprep.subr.mxu0 0.0
            %788 = vmatpush1.msra.mxu0 0.0
            %789 = vmatprep.subr.mxu0 0.0
            %790 = vmatpush1.msra.mxu0 0.0
            %791 = vmatprep.subr.mxu0 0.0
            %792 = vmatpush1.msra.mxu0 0.0
            %793 = vmatprep.subr.mxu0 0.0
            %794 = vmatpush1.msra.mxu0 0.0
            %795 = vmatprep.subr.mxu0 0.0
            %796 = vmatpush1.msra.mxu0 0.0
            %797 = vmatprep.subr.mxu0 0.0
            %798 = vmatpush1.msra.mxu0 0.0
            %799 = vmatprep.subr.mxu0 0.0
            %800 = vmatpush1.msra.mxu0 0.0
            %801 = vmatprep.subr.mxu0 0.0
            %802 = vmatpush1.msra.mxu0 0.0
            %803 = vmatprep.subr.mxu0 0.0
            %804 = vmatpush1.msra.mxu0 0.0
            %805 = vmatprep.subr.mxu0 0.0
            %806 = vmatpush1.msra.mxu0 0.0
            %807 = vmatprep.subr.mxu0 0.0
            %808 = vmatpush1.msra.mxu0 0.0
            %809 = vmatprep.subr.mxu0 0.0
            %810 = vmatpush1.msra.mxu0 0.0
            %811 = vmatprep.subr.mxu0 0.0
            %812 = vmatpush1.msra.mxu0 0.0
            %813 = vmatprep.subr.mxu0 0.0
            %814 = vmatpush1.msra.mxu0 0.0
            %815 = vmatprep.subr.mxu0 0.0
            %816 = vmatpush1.msra.mxu0 0.0
            %817 = vmatprep.subr.mxu0 0.0
            %818 = vmatpush1.msra.mxu0 0.0
            %819 = vmatprep.subr.mxu0 0.0
            %820 = vmatpush1.msra.mxu0 0.0
            %821 = vmatprep.subr.mxu0 0.0
            %822 = vmatpush1.msra.mxu0 0.0
            %823 = vmatprep.subr.mxu0 0.0
            %824 = vmatpush1.msra.mxu0 0.0
            %825 = vmatprep.subr.mxu0 0.0
            %826 = vmatpush1.msra.mxu0 0.0
            %827 = vmatprep.subr.mxu0 0.0
            %828 = vmatpush1.msra.mxu0 0.0
            %829 = vmatprep.subr.mxu0 0.0
            %830 = vmatpush1.msra.mxu0 0.0
            %831 = vmatprep.subr.mxu0 0.0
            %832 = vmatpush1.msra.mxu0 0.0
            %833 = vmatprep.mubr.f32.mxu0 0.0
            %v834 = vand.u32 %v763, 4294901760
            %v835 = vsub.f32 %v763, %v834
            %v836 = vand.u32 %v835, 4294901760
            %v837 = vsub.f32 %v835, %v836
            %v838 = vand.u32 %v837, 4294901760
            %839 = vmatmul.mubr.f32.gmra.mrb[0].mxu0 %v838
            %v840 = vpop.f32.mrb[0].mxu0
            %v841 = vadd.f32 0.0, %v840
            %v842 = vpop.f32.mrb[0].mxu0
            %v843 = vadd.f32 0.0, %v842
            %844 = vdwg.mxu0
            %v845 = vand.u32 %v758, 4294901760
            %v846 = vsub.f32 %v758, %v845
            %v847 = vand.u32 %v846, 4294901760
            %v848 = vsub.f32 %v846, %v847
            %v849 = vand.u32 %v848, 4294901760
            %850 = vmatprep.subr.mxu0 %v849
            %v851 = vand.u32 %v757, 4294901760
            %v852 = vsub.f32 %v757, %v851
            %v853 = vand.u32 %v852, 4294901760
            %v854 = vsub.f32 %v852, %v853
            %v855 = vand.u32 %v854, 4294901760
            %856 = vmatpush1.msra.mxu0 %v855
            %v857 = vand.u32 %v760, 4294901760
            %v858 = vsub.f32 %v760, %v857
            %v859 = vand.u32 %v858, 4294901760
            %v860 = vsub.f32 %v858, %v859
            %v861 = vand.u32 %v860, 4294901760
            %862 = vmatprep.subr.mxu0 %v861
            %v863 = vand.u32 %v759, 4294901760
            %v864 = vsub.f32 %v759, %v863
            %v865 = vand.u32 %v864, 4294901760
            %v866 = vsub.f32 %v864, %v865
            %v867 = vand.u32 %v866, 4294901760
            %868 = vmatpush1.msra.mxu0 %v867
            %869 = vmatprep.subr.mxu0 0.0
            %870 = vmatpush1.msra.mxu0 0.0
            %871 = vmatprep.subr.mxu0 0.0
            %872 = vmatpush1.msra.mxu0 0.0
            %873 = vmatprep.subr.mxu0 0.0
            %874 = vmatpush1.msra.mxu0 0.0
            %875 = vmatprep.subr.mxu0 0.0
            %876 = vmatpush1.msra.mxu0 0.0
            %877 = vmatprep.subr.mxu0 0.0
            %878 = vmatpush1.msra.mxu0 0.0
            %879 = vmatprep.subr.mxu0 0.0
            %880 = vmatpush1.msra.mxu0 0.0
            %881 = vmatprep.subr.mxu0 0.0
            %882 = vmatpush1.msra.mxu0 0.0
            %883 = vmatprep.subr.mxu0 0.0
            %884 = vmatpush1.msra.mxu0 0.0
            %885 = vmatprep.subr.mxu0 0.0
            %886 = vmatpush1.msra.mxu0 0.0
            %887 = vmatprep.subr.mxu0 0.0
            %888 = vmatpush1.msra.mxu0 0.0
            %889 = vmatprep.subr.mxu0 0.0
            %890 = vmatpush1.msra.mxu0 0.0
            %891 = vmatprep.subr.mxu0 0.0
            %892 = vmatpush1.msra.mxu0 0.0
            %893 = vmatprep.subr.mxu0 0.0
            %894 = vmatpush1.msra.mxu0 0.0
            %895 = vmatprep.subr.mxu0 0.0
            %896 = vmatpush1.msra.mxu0 0.0
            %897 = vmatprep.subr.mxu0 0.0
            %898 = vmatpush1.msra.mxu0 0.0
            %899 = vmatprep.subr.mxu0 0.0
            %900 = vmatpush1.msra.mxu0 0.0
            %901 = vmatprep.subr.mxu0 0.0
            %902 = vmatpush1.msra.mxu0 0.0
            %903 = vmatprep.subr.mxu0 0.0
            %904 = vmatpush1.msra.mxu0 0.0
            %905 = vmatprep.subr.mxu0 0.0
            %906 = vmatpush1.msra.mxu0 0.0
            %907 = vmatprep.subr.mxu0 0.0
            %908 = vmatpush1.msra.mxu0 0.0
            %909 = vmatprep.subr.mxu0 0.0
            %910 = vmatpush1.msra.mxu0 0.0
            %911 = vmatprep.subr.mxu0 0.0
            %912 = vmatpush1.msra.mxu0 0.0
            %913 = vmatprep.subr.mxu0 0.0
            %914 = vmatpush1.msra.mxu0 0.0
            %915 = vmatprep.subr.mxu0 0.0
            %916 = vmatpush1.msra.mxu0 0.0
            %917 = vmatprep.subr.mxu0 0.0
            %918 = vmatpush1.msra.mxu0 0.0
            %919 = vmatprep.subr.mxu0 0.0
            %920 = vmatpush1.msra.mxu0 0.0
            %921 = vmatprep.subr.mxu0 0.0
            %922 = vmatpush1.msra.mxu0 0.0
            %923 = vmatprep.subr.mxu0 0.0
            %924 = vmatpush1.msra.mxu0 0.0
            %925 = vmatprep.subr.mxu0 0.0
            %926 = vmatpush1.msra.mxu0 0.0
            %927 = vmatprep.subr.mxu0 0.0
            %928 = vmatpush1.msra.mxu0 0.0
            %929 = vmatprep.mubr.f32.mxu0 0.0
            %v930 = vand.u32 %v763, 4294901760
            %931 = vmatmul.mubr.f32.gmra.mrb[0].mxu0 %v930
            %v932 = vpop.f32.mrb[0].mxu0
            %v933 = vadd.f32 %v841, %v932
            %v934 = vpop.f32.mrb[0].mxu0
            %v935 = vadd.f32 %v843, %v934
            %936 = vdwg.mxu0
            %v937 = vand.u32 %v758, 4294901760
            %v938 = vsub.f32 %v758, %v937
            %939 = vmatprep.subr.mxu0 %v938
            %v940 = vand.u32 %v757, 4294901760
            %v941 = vsub.f32 %v757, %v940
            %942 = vmatpush1.msra.mxu0 %v941
            %v943 = vand.u32 %v760, 4294901760
            %v944 = vsub.f32 %v760, %v943
            %945 = vmatprep.subr.mxu0 %v944
            %v946 = vand.u32 %v759, 4294901760
            %v947 = vsub.f32 %v759, %v946
            %948 = vmatpush1.msra.mxu0 %v947
            %949 = vmatprep.subr.mxu0 0.0
            %950 = vmatpush1.msra.mxu0 0.0
            %951 = vmatprep.subr.mxu0 0.0
            %952 = vmatpush1.msra.mxu0 0.0
            %953 = vmatprep.subr.mxu0 0.0
            %954 = vmatpush1.msra.mxu0 0.0
            %955 = vmatprep.subr.mxu0 0.0
            %956 = vmatpush1.msra.mxu0 0.0
            %957 = vmatprep.subr.mxu0 0.0
            %958 = vmatpush1.msra.mxu0 0.0
            %959 = vmatprep.subr.mxu0 0.0
            %960 = vmatpush1.msra.mxu0 0.0
            %961 = vmatprep.subr.mxu0 0.0
            %962 = vmatpush1.msra.mxu0 0.0
            %963 = vmatprep.subr.mxu0 0.0
            %964 = vmatpush1.msra.mxu0 0.0
            %965 = vmatprep.subr.mxu0 0.0
            %966 = vmatpush1.msra.mxu0 0.0
            %967 = vmatprep.subr.mxu0 0.0
            %968 = vmatpush1.msra.mxu0 0.0
            %969 = vmatprep.subr.mxu0 0.0
            %970 = vmatpush1.msra.mxu0 0.0
            %971 = vmatprep.subr.mxu0 0.0
            %972 = vmatpush1.msra.mxu0 0.0
            %973 = vmatprep.subr.mxu0 0.0
            %974 = vmatpush1.msra.mxu0 0.0
            %975 = vmatprep.subr.mxu0 0.0
            %976 = vmatpush1.msra.mxu0 0.0
            %977 = vmatprep.subr.mxu0 0.0
            %978 = vmatpush1.msra.mxu0 0.0
            %979 = vmatprep.subr.mxu0 0.0
            %980 = vmatpush1.msra.mxu0 0.0
            %981 = vmatprep.subr.mxu0 0.0
            %982 = vmatpush1.msra.mxu0 0.0
            %983 = vmatprep.subr.mxu0 0.0
            %984 = vmatpush1.msra.mxu0 0.0
            %985 = vmatprep.subr.mxu0 0.0
            %986 = vmatpush1.msra.mxu0 0.0
            %987 = vmatprep.subr.mxu0 0.0
            %988 = vmatpush1.msra.mxu0 0.0
            %989 = vmatprep.subr.mxu0 0.0
            %990 = vmatpush1.msra.mxu0 0.0
            %991 = vmatprep.subr.mxu0 0.0
            %992 = vmatpush1.msra.mxu0 0.0
            %993 = vmatprep.subr.mxu0 0.0
            %994 = vmatpush1.msra.mxu0 0.0
            %995 = vmatprep.subr.mxu0 0.0
            %996 = vmatpush1.msra.mxu0 0.0
            %997 = vmatprep.subr.mxu0 0.0
            %998 = vmatpush1.msra.mxu0 0.0
            %999 = vmatprep.subr.mxu0 0.0
            %1000 = vmatpush1.msra.mxu0 0.0
            %1001 = vmatprep.subr.mxu0 0.0
            %1002 = vmatpush1.msra.mxu0 0.0
            %1003 = vmatprep.subr.mxu0 0.0
            %1004 = vmatpush1.msra.mxu0 0.0
            %1005 = vmatprep.subr.mxu0 0.0
            %1006 = vmatpush1.msra.mxu0 0.0
            %1007 = vmatprep.subr.mxu0 0.0
            %1008 = vmatpush1.msra.mxu0 0.0
            %1009 = vmatprep.mubr.f32.mxu0 0.0
            %v1010 = vand.u32 %v763, 4294901760
            %v1011 = vsub.f32 %v763, %v1010
            %1012 = vmatmul.mubr.f32.gmra.mrb[0].mxu0 %v1011
            %v1013 = vpop.f32.mrb[0].mxu0
            %v1014 = vadd.f32 %v933, %v1013
            %v1015 = vpop.f32.mrb[0].mxu0
            %v1016 = vadd.f32 %v935, %v1015
            %1017 = vdwg.mxu0
            %v1018 = vand.u32 %v758, 4294901760
            %1019 = vmatprep.subr.mxu0 %v1018
            %v1020 = vand.u32 %v757, 4294901760
            %1021 = vmatpush1.msra.mxu0 %v1020
            %v1022 = vand.u32 %v760, 4294901760
            %1023 = vmatprep.subr.mxu0 %v1022
            %v1024 = vand.u32 %v759, 4294901760
            %1025 = vmatpush1.msra.mxu0 %v1024
            %1026 = vmatprep.subr.mxu0 0.0
            %1027 = vmatpush1.msra.mxu0 0.0
            %1028 = vmatprep.subr.mxu0 0.0
            %1029 = vmatpush1.msra.mxu0 0.0
            %1030 = vmatprep.subr.mxu0 0.0
            %1031 = vmatpush1.msra.mxu0 0.0
            %1032 = vmatprep.subr.mxu0 0.0
            %1033 = vmatpush1.msra.mxu0 0.0
            %1034 = vmatprep.subr.mxu0 0.0
            %1035 = vmatpush1.msra.mxu0 0.0
            %1036 = vmatprep.subr.mxu0 0.0
            %1037 = vmatpush1.msra.mxu0 0.0
            %1038 = vmatprep.subr.mxu0 0.0
            %1039 = vmatpush1.msra.mxu0 0.0
            %1040 = vmatprep.subr.mxu0 0.0
            %1041 = vmatpush1.msra.mxu0 0.0
            %1042 = vmatprep.subr.mxu0 0.0
            %1043 = vmatpush1.msra.mxu0 0.0
            %1044 = vmatprep.subr.mxu0 0.0
            %1045 = vmatpush1.msra.mxu0 0.0
            %1046 = vmatprep.subr.mxu0 0.0
            %1047 = vmatpush1.msra.mxu0 0.0
            %1048 = vmatprep.subr.mxu0 0.0
            %1049 = vmatpush1.msra.mxu0 0.0
            %1050 = vmatprep.subr.mxu0 0.0
            %1051 = vmatpush1.msra.mxu0 0.0
            %1052 = vmatprep.subr.mxu0 0.0
            %1053 = vmatpush1.msra.mxu0 0.0
            %1054 = vmatprep.subr.mxu0 0.0
            %1055 = vmatpush1.msra.mxu0 0.0
            %1056 = vmatprep.subr.mxu0 0.0
            %1057 = vmatpush1.msra.mxu0 0.0
            %1058 = vmatprep.subr.mxu0 0.0
            %1059 = vmatpush1.msra.mxu0 0.0
            %1060 = vmatprep.subr.mxu0 0.0
            %1061 = vmatpush1.msra.mxu0 0.0
            %1062 = vmatprep.subr.mxu0 0.0
            %1063 = vmatpush1.msra.mxu0 0.0
            %1064 = vmatprep.subr.mxu0 0.0
            %1065 = vmatpush1.msra.mxu0 0.0
            %1066 = vmatprep.subr.mxu0 0.0
            %1067 = vmatpush1.msra.mxu0 0.0
            %1068 = vmatprep.subr.mxu0 0.0
            %1069 = vmatpush1.msra.mxu0 0.0
            %1070 = vmatprep.subr.mxu0 0.0
            %1071 = vmatpush1.msra.mxu0 0.0
            %1072 = vmatprep.subr.mxu0 0.0
            %1073 = vmatpush1.msra.mxu0 0.0
            %1074 = vmatprep.subr.mxu0 0.0
            %1075 = vmatpush1.msra.mxu0 0.0
            %1076 = vmatprep.subr.mxu0 0.0
            %1077 = vmatpush1.msra.mxu0 0.0
            %1078 = vmatprep.subr.mxu0 0.0
            %1079 = vmatpush1.msra.mxu0 0.0
            %1080 = vmatprep.subr.mxu0 0.0
            %1081 = vmatpush1.msra.mxu0 0.0
            %1082 = vmatprep.subr.mxu0 0.0
            %1083 = vmatpush1.msra.mxu0 0.0
            %1084 = vmatprep.subr.mxu0 0.0
            %1085 = vmatpush1.msra.mxu0 0.0
            %1086 = vmatprep.mubr.f32.mxu0 0.0
            %v1087 = vand.u32 %v763, 4294901760
            %v1088 = vsub.f32 %v763, %v1087
            %v1089 = vand.u32 %v1088, 4294901760
            %1090 = vmatmul.mubr.f32.gmra.mrb[0].mxu0 %v1089
            %v1091 = vpop.f32.mrb[0].mxu0
            %v1092 = vadd.f32 %v1014, %v1091
            %v1093 = vpop.f32.mrb[0].mxu0
            %v1094 = vadd.f32 %v1016, %v1093
            %1095 = vdwg.mxu0
            %v1096 = vand.u32 %v758, 4294901760
            %v1097 = vsub.f32 %v758, %v1096
            %v1098 = vand.u32 %v1097, 4294901760
            %1099 = vmatprep.subr.mxu0 %v1098
            %v1100 = vand.u32 %v757, 4294901760
            %v1101 = vsub.f32 %v757, %v1100
            %v1102 = vand.u32 %v1101, 4294901760
            %1103 = vmatpush1.msra.mxu0 %v1102
            %v1104 = vand.u32 %v760, 4294901760
            %v1105 = vsub.f32 %v760, %v1104
            %v1106 = vand.u32 %v1105, 4294901760
            %1107 = vmatprep.subr.mxu0 %v1106
            %v1108 = vand.u32 %v759, 4294901760
            %v1109 = vsub.f32 %v759, %v1108
            %v1110 = vand.u32 %v1109, 4294901760
            %1111 = vmatpush1.msra.mxu0 %v1110
            %1112 = vmatprep.subr.mxu0 0.0
            %1113 = vmatpush1.msra.mxu0 0.0
            %1114 = vmatprep.subr.mxu0 0.0
            %1115 = vmatpush1.msra.mxu0 0.0
            %1116 = vmatprep.subr.mxu0 0.0
            %1117 = vmatpush1.msra.mxu0 0.0
            %1118 = vmatprep.subr.mxu0 0.0
            %1119 = vmatpush1.msra.mxu0 0.0
            %1120 = vmatprep.subr.mxu0 0.0
            %1121 = vmatpush1.msra.mxu0 0.0
            %1122 = vmatprep.subr.mxu0 0.0
            %1123 = vmatpush1.msra.mxu0 0.0
            %1124 = vmatprep.subr.mxu0 0.0
            %1125 = vmatpush1.msra.mxu0 0.0
            %1126 = vmatprep.subr.mxu0 0.0
            %1127 = vmatpush1.msra.mxu0 0.0
            %1128 = vmatprep.subr.mxu0 0.0
            %1129 = vmatpush1.msra.mxu0 0.0
            %1130 = vmatprep.subr.mxu0 0.0
            %1131 = vmatpush1.msra.mxu0 0.0
            %1132 = vmatprep.subr.mxu0 0.0
            %1133 = vmatpush1.msra.mxu0 0.0
            %1134 = vmatprep.subr.mxu0 0.0
            %1135 = vmatpush1.msra.mxu0 0.0
            %1136 = vmatprep.subr.mxu0 0.0
            %1137 = vmatpush1.msra.mxu0 0.0
            %1138 = vmatprep.subr.mxu0 0.0
            %1139 = vmatpush1.msra.mxu0 0.0
            %1140 = vmatprep.subr.mxu0 0.0
            %1141 = vmatpush1.msra.mxu0 0.0
            %1142 = vmatprep.subr.mxu0 0.0
            %1143 = vmatpush1.msra.mxu0 0.0
            %1144 = vmatprep.subr.mxu0 0.0
            %1145 = vmatpush1.msra.mxu0 0.0
            %1146 = vmatprep.subr.mxu0 0.0
            %1147 = vmatpush1.msra.mxu0 0.0
            %1148 = vmatprep.subr.mxu0 0.0
            %1149 = vmatpush1.msra.mxu0 0.0
            %1150 = vmatprep.subr.mxu0 0.0
            %1151 = vmatpush1.msra.mxu0 0.0
            %1152 = vmatprep.subr.mxu0 0.0
            %1153 = vmatpush1.msra.mxu0 0.0
            %1154 = vmatprep.subr.mxu0 0.0
            %1155 = vmatpush1.msra.mxu0 0.0
            %1156 = vmatprep.subr.mxu0 0.0
            %1157 = vmatpush1.msra.mxu0 0.0
            %1158 = vmatprep.subr.mxu0 0.0
            %1159 = vmatpush1.msra.mxu0 0.0
            %1160 = vmatprep.subr.mxu0 0.0
            %1161 = vmatpush1.msra.mxu0 0.0
            %1162 = vmatprep.subr.mxu0 0.0
            %1163 = vmatpush1.msra.mxu0 0.0
            %1164 = vmatprep.subr.mxu0 0.0
            %1165 = vmatpush1.msra.mxu0 0.0
            %1166 = vmatprep.subr.mxu0 0.0
            %1167 = vmatpush1.msra.mxu0 0.0
            %1168 = vmatprep.subr.mxu0 0.0
            %1169 = vmatpush1.msra.mxu0 0.0
            %1170 = vmatprep.subr.mxu0 0.0
            %1171 = vmatpush1.msra.mxu0 0.0
            %1172 = vmatprep.mubr.f32.mxu0 0.0
            %v1173 = vand.u32 %v763, 4294901760
            %1174 = vmatmul.mubr.f32.gmra.mrb[0].mxu0 %v1173
            %v1175 = vpop.f32.mrb[0].mxu0
            %v1176 = vadd.f32 %v1092, %v1175
            %v1177 = vpop.f32.mrb[0].mxu0
            %v1178 = vadd.f32 %v1094, %v1177
            %1179 = vdwg.mxu0
            %v1180 = vand.u32 %v758, 4294901760
            %1181 = vmatprep.subr.mxu0 %v1180
            %v1182 = vand.u32 %v757, 4294901760
            %1183 = vmatpush1.msra.mxu0 %v1182
            %v1184 = vand.u32 %v760, 4294901760
            %1185 = vmatprep.subr.mxu0 %v1184
            %v1186 = vand.u32 %v759, 4294901760
            %1187 = vmatpush1.msra.mxu0 %v1186
            %1188 = vmatprep.subr.mxu0 0.0
            %1189 = vmatpush1.msra.mxu0 0.0
            %1190 = vmatprep.subr.mxu0 0.0
            %1191 = vmatpush1.msra.mxu0 0.0
            %1192 = vmatprep.subr.mxu0 0.0
            %1193 = vmatpush1.msra.mxu0 0.0
            %1194 = vmatprep.subr.mxu0 0.0
            %1195 = vmatpush1.msra.mxu0 0.0
            %1196 = vmatprep.subr.mxu0 0.0
            %1197 = vmatpush1.msra.mxu0 0.0
            %1198 = vmatprep.subr.mxu0 0.0
            %1199 = vmatpush1.msra.mxu0 0.0
            %1200 = vmatprep.subr.mxu0 0.0
            %1201 = vmatpush1.msra.mxu0 0.0
            %1202 = vmatprep.subr.mxu0 0.0
            %1203 = vmatpush1.msra.mxu0 0.0
            %1204 = vmatprep.subr.mxu0 0.0
            %1205 = vmatpush1.msra.mxu0 0.0
            %1206 = vmatprep.subr.mxu0 0.0
            %1207 = vmatpush1.msra.mxu0 0.0
            %1208 = vmatprep.subr.mxu0 0.0
            %1209 = vmatpush1.msra.mxu0 0.0
            %1210 = vmatprep.subr.mxu0 0.0
            %1211 = vmatpush1.msra.mxu0 0.0
            %1212 = vmatprep.subr.mxu0 0.0
            %1213 = vmatpush1.msra.mxu0 0.0
            %1214 = vmatprep.subr.mxu0 0.0
            %1215 = vmatpush1.msra.mxu0 0.0
            %1216 = vmatprep.subr.mxu0 0.0
            %1217 = vmatpush1.msra.mxu0 0.0
            %1218 = vmatprep.subr.mxu0 0.0
            %1219 = vmatpush1.msra.mxu0 0.0
            %1220 = vmatprep.subr.mxu0 0.0
            %1221 = vmatpush1.msra.mxu0 0.0
            %1222 = vmatprep.subr.mxu0 0.0
            %1223 = vmatpush1.msra.mxu0 0.0
            %1224 = vmatprep.subr.mxu0 0.0
            %1225 = vmatpush1.msra.mxu0 0.0
            %1226 = vmatprep.subr.mxu0 0.0
            %1227 = vmatpush1.msra.mxu0 0.0
            %1228 = vmatprep.subr.mxu0 0.0
            %1229 = vmatpush1.msra.mxu0 0.0
            %1230 = vmatprep.subr.mxu0 0.0
            %1231 = vmatpush1.msra.mxu0 0.0
            %1232 = vmatprep.subr.mxu0 0.0
            %1233 = vmatpush1.msra.mxu0 0.0
            %1234 = vmatprep.subr.mxu0 0.0
            %1235 = vmatpush1.msra.mxu0 0.0
            %1236 = vmatprep.subr.mxu0 0.0
            %1237 = vmatpush1.msra.mxu0 0.0
            %1238 = vmatprep.subr.mxu0 0.0
            %1239 = vmatpush1.msra.mxu0 0.0
            %1240 = vmatprep.subr.mxu0 0.0
            %1241 = vmatpush1.msra.mxu0 0.0
            %1242 = vmatprep.subr.mxu0 0.0
            %1243 = vmatpush1.msra.mxu0 0.0
            %1244 = vmatprep.subr.mxu0 0.0
            %1245 = vmatpush1.msra.mxu0 0.0
            %1246 = vmatprep.subr.mxu0 0.0
            %1247 = vmatpush1.msra.mxu0 0.0
            %1248 = vmatprep.mubr.f32.mxu0 0.0
            %v1249 = vand.u32 %v763, 4294901760
            %1250 = vmatmul.mubr.f32.gmra.mrb[0].mxu0 %v1249
            %v1251 = vpop.f32.mrb[0].mxu0
            %v1252 = vadd.f32 %v1176, %v1251
            %v1253 = vpop.f32.mrb[0].mxu0
            %v1254 = vadd.f32 %v1178, %v1253
            %1255 = vdwg.mxu0
            %v1258 = vcombine.low %v1252, %v1254
            %1260 = vst [vmem:[#allocation2] sm:$0xff] %v1258
          $region56: #{tpu_custom_call.1} parent=51 // pred_fallthru
            _
          %v1261 = vld [vmem:[#allocation2] sm:$0xff]
          %1262 = vst [vmem:[%s237] sm:$0xff] %v1261
        $region52: #{tpu_custom_call.1} parent=31 // pred_fallthru
          _
        %s1263 = sand.u32 %s120, 1
        %s1264 = scalar_lea.sflag [#allocation5], %s1263
        %s1265 = sand.u32 %s120, 1
        %s1266 = smul.addr %s1265, 8
        %s1267 = scalar_lea.vmem [#allocation9], %s1266
        // Predicated region
        $region57: #{tpu_custom_call.1} parent=31 // pred_check
          %p1268 = pneg %p130
        $region58: #{tpu_custom_call.1} parent=31 // pred_check_branch
          %1270 = sbr.rel (%p1268) target = $region60
        $region59: #{tpu_custom_call.1} parent=31 // pred_region
          %s1271 = smul.u32 2, %s28
          %s1273 = ssub.s32 128, 128
          %1274 = vsyncadd %s1264, %s1273
          %s1275 = smul.addr %s26, 2
          %s1276 = sadd.s32 %s1271, %s1275
          %s1277 = smul.addr %s27, 4
          %s1278 = sadd.s32 %s1276, %s1277
          %s1279 = smul.addr %s1278, 64
          %s1280 = scalar_lea.hbm %s3, %s1279
          %s1282 = sshll.u32 %s1267, 4
          %s1283 = int_to_ptr.vmem [resolvable:$true] %s1282
          %1285 = dma.vmem_to_hbm [thread:$0]  %s1283, 128, %s1280, %s1264
        $region60: #{tpu_custom_call.1} parent=31 // pred_fallthru
          _
      $region32: #{tpu_custom_call.1} parent=5 // pred_fallthru
        _
      %p1286 = scmp.le.s32.totalorder 2, %s16
      // Predicated region
      $region61: #{tpu_custom_call.1} parent=5 // pred_check
        %p1287 = pneg %p1286
      $region62: #{tpu_custom_call.1} parent=5 // pred_check_branch
        %1289 = sbr.rel (%p1287) target = $region64
      $region63: #{tpu_custom_call.1} parent=5 // pred_region
        %s1290 = ssub.s32 %s16, 2
        // Predicated region
        $region65: #{tpu_custom_call.1} parent=63 // pred_check
          %p1291 = pneg %p136
        $region66: #{tpu_custom_call.1} parent=63 // pred_check_branch
          %1293 = sbr.rel (%p1291) target = $region68
        $region67: #{tpu_custom_call.1} parent=63 // pred_region
          %s1294 = sand.u32 %s121, 1
          %s1295 = scalar_lea.sflag [#allocation5], %s1294
          %s1296 = sand.u32 %s121, 1
          %s1297 = smul.addr %s1296, 8
          %s1298 = scalar_lea.vmem [#allocation9], %s1297
          %1299 = dma.done %s1295, 128
        $region68: #{tpu_custom_call.1} parent=63 // pred_fallthru
          _
      $region64: #{tpu_custom_call.1} parent=5 // pred_fallthru
        _
    $region6: #{tpu_custom_call.1} parent=1 // loop_footer
      %s20 = sadd.s32 1, %s16
    $region7: #{tpu_custom_call.1} parent=1 // loop_footer_branch
      %15 = sbr.rel target = $region3
    $region8: #{tpu_custom_call.1} parent=1 // loop_exit
      _
    %1300 = vsyncpa [#allocation4], 1
    %s1301 = scalar_lea.sflag [#allocation4], 1
    %1302 = vsyncpa %s1301, 1
    %1303 = vsyncpa [#allocation7], 1
    %1304 = vsyncpa [#allocation5], 1
    %s1305 = scalar_lea.sflag [#allocation5], 1
    %1306 = vsyncpa %s1305, 1

</llo_original>
